<compile_context>
chip_gen: v5e
topology: v5e:2x2
jax: 0.10.0
libtpu: 0.0.40
codegen_flags: <defaults>
</compile_context>

<pallas_src>
import jax
import jax.numpy as jnp
from jax import lax
from jax.experimental import pallas as pl
from jax.experimental.pallas import tpu as pltpu


def _round_up(x, m):
    return ((x + m - 1) // m) * m


def _cve_gather_kernel(idx_ref, table_ref, out_ref):
    # idx_ref:   (tokf, fold)          int32  -- ids, pre-clipped, pre-offset by j*V
    # table_ref: (fold*V, fold*D)      f32    -- block-diagonal pre-normalized table
    # out_ref:   (tokf, fold*D)        f32    -- lane-dense output slab
    tokf, fold = idx_ref.shape
    kdim = table_ref.shape[0]

    # Hoisted iota (JAX does not CSE broadcast_in_dim).
    col = lax.broadcasted_iota(jnp.int32, (tokf, kdim), 1)

    # One-hot over the fold*V columns: token j of output row r hits column
    # idx[r, j] + j*V, so the per-j hit masks are disjoint and OR-able.
    hit = idx_ref[:, 0:1] == col
    for j in range(1, fold):  # static unroll, fold <= 128 // D
        hit = hit | (idx_ref[:, j:j + 1] == col)
    one_hot = hit.astype(jnp.float32)

    # Single MXU push: gather + lane placement in one (tokf,K)@(K,128) matmul.
    out_ref[...] = jnp.dot(one_hot, table_ref[...],
                           preferred_element_type=jnp.float32)


def category_value_encoder(idx, emb_table, ln_weight, ln_bias, *, eps=1e-5,
                           tok_block=8192):
    """idx: (B, S) integer tokens -> (B, S, D) float32 (embedding + LayerNorm)."""
    B, S = idx.shape
    V, D = emb_table.shape
    N = B * S

    # ---- Hoist LayerNorm + affine into a one-time table precompute --------
    tbl = emb_table.astype(jnp.float32)
    mean = jnp.mean(tbl, axis=-1, keepdims=True)
    var = jnp.mean((tbl - mean) ** 2, axis=-1, keepdims=True)
    table_ln = ((tbl - mean) * lax.rsqrt(var + eps)
                * ln_weight.astype(jnp.float32).reshape(1, D)
                + ln_bias.astype(jnp.float32).reshape(1, D))

    # ---- Tiling: pack `fold` tokens per 128-lane output row ---------------
    fold = 128 // D if (D <= 128 and 128 % D == 0) else 1
    unit = 8 * fold                          # tokens per minimal (8, 128) out tile

    n_units = max(1, _round_up(N, unit) // unit)
    tb_units = max(1, min(max(tok_block, unit) // unit, n_units))
    if n_units >= 2:
        # Keep at least 2 grid steps so the "parallel" token axis can be
        # sharded across v7x's 2 TensorCores (no-op on v5e/v6e).
        tb_units = max(1, min(tb_units, n_units // 2))
    tok_block = tb_units * unit
    n_tiles = -(-n_units // tb_units)        # cdiv
    N_pad = n_tiles * tok_block
    tokf = tok_block // fold                 # output rows per grid step

    # ---- Inputs: clipped, padded, pre-offset ids; block-diagonal table ----
    idx_flat = jnp.clip(idx.reshape(-1).astype(jnp.int32), 0, V - 1)
    idx_flat = jnp.pad(idx_flat, (0, N_pad - N))          # pad tail with id 0
    idx_grouped = idx_flat.reshape(N_pad // fold, fold)
    if fold > 1:
        idx_grouped = idx_grouped + (jnp.arange(fold, dtype=jnp.int32)
                                     .reshape(1, fold) * V)
        # kron(eye, table_ln): exact 0/1 placement -> block-diagonal table.
        table_in = jnp.kron(jnp.eye(fold, dtype=jnp.float32), table_ln)
    else:
        table_in = table_ln

    # ---- Right-sized VMEM limit (2x margin, capped at 32 MiB) -------------
    lane = 128
    out_lanes = _round_up(fold * D, lane)
    oh_lanes = _round_up(fold * V, lane)
    footprint = (2 * tokf * out_lanes * 4                    # out slab, 2 bufs
                 + 2 * tokf * lane * 4                       # id block, 2 bufs
                 + 2 * _round_up(fold * V, 8) * out_lanes * 4  # resident table
                 + 3 * tokf * oh_lanes * 4)                  # iota + one-hot + slack
    vmem_limit = int(min(32 * 2**20, max(16 * 2**20, 2 * footprint)))

    out = pl.pallas_call(
        _cve_gather_kernel,
        out_shape=jax.ShapeDtypeStruct((N_pad // fold, fold * D), jnp.float32),
        grid_spec=pl.GridSpec(
            grid=(n_tiles,),
            in_specs=[
                pl.BlockSpec((tokf, fold), lambda i: (i, 0)),        # token ids
                pl.BlockSpec((fold * V, fold * D), lambda i: (0, 0)),  # table (resident)
            ],
            out_specs=pl.BlockSpec((tokf, fold * D), lambda i: (i, 0)),
        ),
        compiler_params=pltpu.CompilerParams(
            dimension_semantics=("parallel",),
            vmem_limit_bytes=vmem_limit),
    )(idx_grouped, table_in)

    # (N_pad//fold, fold*D) -> (N_pad, D) is row-major identical (free); then
    # drop the padded tail tokens.
    out = out.reshape(N_pad, D)[:N]
    return out.reshape(B, S, D)


def _reference(idx, emb_table, ln_weight, ln_bias, eps=1e-5):
    rows = jnp.take(emb_table, idx, axis=0).astype(jnp.float32)
    mean = jnp.mean(rows, axis=-1, keepdims=True)
    var = jnp.mean((rows - mean) ** 2, axis=-1, keepdims=True)
    return (rows - mean) * lax.rsqrt(var + eps) * ln_weight + ln_bias


if __name__ == "__main__":
    # Module config (synthetic, deterministic init):
    num_embeddings = 64
    embedding_dim = 32
    padding_idx = 0

    # Inputs: batch=2, seq=8 integer category tokens.
    B, S = 2, 8
    key = jax.random.PRNGKey(0)
    k_idx, k_emb = jax.random.split(key)

    idx = jax.random.randint(k_idx, (B, S), 0, num_embeddings, dtype=jnp.int32)

    # nn.Embedding default init: N(0, 1); padding_idx row zeroed.
    emb_table = jax.random.normal(k_emb, (num_embeddings, embedding_dim),
                                  dtype=jnp.float32)
    emb_table = emb_table.at[padding_idx].set(0.0)

    # nn.LayerNorm default init: weight=1, bias=0.
    ln_weight = jnp.ones((embedding_dim,), dtype=jnp.float32)
    ln_bias = jnp.zeros((embedding_dim,), dtype=jnp.float32)

    out = category_value_encoder(idx, emb_table, ln_weight, ln_bias)
    out = jax.block_until_ready(out)

    ref = _reference(idx, emb_table, ln_weight, ln_bias)
    assert out.shape == (B, S, embedding_dim)
    assert jnp.allclose(out, ref, atol=1e-5, rtol=1e-5)

    print("KERNEL_OK")
</pallas_src>

<mosaic_0001>
module attributes {stable_mosaic.version = 11 : i64} {
  func.func @_cve_gather_kernel(%arg0: i32, %arg1: memref<8x4xi32, #tpu.memory_space<vmem>>, %arg2: memref<256x128xf32, #tpu.memory_space<vmem>>, %arg3: memref<8x128xf32, #tpu.memory_space<vmem>>) attributes {dimension_semantics = [#tpu.dimension_semantics<parallel>], iteration_bounds = array<i64: 1>, scalar_prefetch = 0 : i64, scratch_operands = 0 : i64, tpu.core_type = #tpu.core_type<tc>, window_params = [{transform_indices = @transform_0, window_bounds = array<i64: 8, 4>}, {pipeline_mode = #tpu.pipeline_mode<synchronous>, transform_indices = @transform_1, window_bounds = array<i64: 256, 128>}, {transform_indices = @transform_2, window_bounds = array<i64: 8, 128>}]} {
    %0 = tpu.iota {dimensions = array<i32: 1>} : vector<8x256xi32>
    %c0 = arith.constant 0 : index
    %c0_0 = arith.constant 0 : index
    %1 = vector.load %arg1[%c0, %c0_0] : memref<8x4xi32, #tpu.memory_space<vmem>>, vector<8x1xi32>
    %2 = vector.broadcast %1 : vector<8x1xi32> to vector<8x256xi32>
    %3 = arith.cmpi eq, %2, %0 : vector<8x256xi32>
    %c0_1 = arith.constant 0 : index
    %c1 = arith.constant 1 : index
    %4 = vector.load %arg1[%c0_1, %c1] : memref<8x4xi32, #tpu.memory_space<vmem>>, vector<8x1xi32>
    %5 = vector.broadcast %4 : vector<8x1xi32> to vector<8x256xi32>
    %6 = arith.cmpi eq, %5, %0 : vector<8x256xi32>
    %7 = arith.ori %3, %6 : vector<8x256xi1>
    %c0_2 = arith.constant 0 : index
    %c2 = arith.constant 2 : index
    %8 = vector.load %arg1[%c0_2, %c2] : memref<8x4xi32, #tpu.memory_space<vmem>>, vector<8x1xi32>
    %9 = vector.broadcast %8 : vector<8x1xi32> to vector<8x256xi32>
    %10 = arith.cmpi eq, %9, %0 : vector<8x256xi32>
    %11 = arith.ori %7, %10 : vector<8x256xi1>
    %c0_3 = arith.constant 0 : index
    %c3 = arith.constant 3 : index
    %12 = vector.load %arg1[%c0_3, %c3] : memref<8x4xi32, #tpu.memory_space<vmem>>, vector<8x1xi32>
    %13 = vector.broadcast %12 : vector<8x1xi32> to vector<8x256xi32>
    %14 = arith.cmpi eq, %13, %0 : vector<8x256xi32>
    %15 = arith.ori %11, %14 : vector<8x256xi1>
    %16 = arith.extui %15 : vector<8x256xi1> to vector<8x256xi32>
    %17 = arith.sitofp %16 : vector<8x256xi32> to vector<8x256xf32>
    %c0_4 = arith.constant 0 : index
    %c0_5 = arith.constant 0 : index
    %18 = vector.load %arg2[%c0_4, %c0_5] : memref<256x128xf32, #tpu.memory_space<vmem>>, vector<256x128xf32>
    %cst = arith.constant dense<0.000000e+00> : vector<8x128xf32>
    %19 = tpu.matmul %17, %18, %cst {dimension_numbers = #tpu.dot_dimension_numbers<[1], [0], [0], [1], [0, 0, 1, 1], [], []>} : vector<8x256xf32>, vector<256x128xf32>, vector<8x128xf32> -> vector<8x128xf32>
    %c0_6 = arith.constant 0 : index
    %c0_7 = arith.constant 0 : index
    %20 = vector.load %arg3[%c0_6, %c0_7] : memref<8x128xf32, #tpu.memory_space<vmem>>, vector<8x128xf32>
    tpu.vector_store %arg3[%c0_6, %c0_7], %19 {strides = array<i32>} : memref<8x128xf32, #tpu.memory_space<vmem>>, vector<8x128xf32>,
    return
  }
  func.func @transform_0(%arg0: i32) -> (i32, i32) {
    %c0_i32 = arith.constant 0 : i32
    %c0_i32_0 = arith.constant 0 : i32
    return %arg0, %c0_i32 : i32, i32
  }
  func.func @transform_1(%arg0: i32) -> (i32, i32) {
    %c0_i32 = arith.constant 0 : i32
    %c0_i32_0 = arith.constant 0 : i32
    %c0_i32_1 = arith.constant 0 : i32
    return %c0_i32, %c0_i32_0 : i32, i32
  }
  func.func @transform_2(%arg0: i32) -> (i32, i32) {
    %c0_i32 = arith.constant 0 : i32
    %c0_i32_0 = arith.constant 0 : i32
    return %arg0, %c0_i32 : i32, i32
  }
}

</mosaic_0001>

<llo_original>
// kernel: tpu_custom_call.1
$region0: #{tpu_custom_call.1}
  #allocation0 [shape = 'u32[]', space=smem, size = 0x4, offset = 0x4, fixed_abs, tag = 'smem constant byte address 0x4 - core index']
  #allocation1 [shape = 'u32[72,128]{1,0:T(1,128)}', space=vmem, size = 0x9000, scoped, tag = 'internal scratch']
  %s0 = inlined_call_operand.vmem [shape: s32[8,4], index: 0, kind: input, shape index: {}]
  %s1 = inlined_call_operand.hbm [shape: f32[256,128], index: 1, kind: input, shape index: {}]
  %s2 = inlined_call_operand.hbm [shape: f32[8,128], index: 2, kind: output, shape index: {}]
  %s3 = sld [smem:[#allocation0]]
  $region22: #{tpu_custom_call.1} parent=0
    _
  %s5 = ssub.s32 1, %s3
  %s6 = scalar_select 0, %s5, %s3
  $region1: #{tpu_custom_call.1} parent=0
    #allocation2 [shape = 'u8[131072]{0}', space=vmem, size = 0x20000, scoped, tag = 'input window, operand 1, single buffered']
    #allocation3 [shape = 's32[1]{0}', space=sflag, size = 0x4, scoped, tag = 'scoped memory for tpu_custom_call.1']
    #allocation4 [shape = 's32[1]{0}', space=sflag, size = 0x4, scoped, tag = 'scoped memory for tpu_custom_call.1']
    #allocation5 [shape = 'u8[4096]{0}', space=vmem, size = 0x1000, scoped, tag = 'output window, operand 0, single buffered']
    %7 = vsyncpa [#allocation3], 0
    %8 = vsyncpa [#allocation4], 0
    // Predicated region
    $region2: #{tpu_custom_call.1} parent=1 // pred_check
      _
    $region3: #{tpu_custom_call.1} parent=1 // pred_check_branch
      %10 = sbr.rel (0) target = $region5
    $region4: #{tpu_custom_call.1} parent=1 // pred_region
      _
    $region5: #{tpu_custom_call.1} parent=1 // pred_fallthru
      _
    // Predicated region
    $region6: #{tpu_custom_call.1} parent=1 // pred_check
      _
    $region7: #{tpu_custom_call.1} parent=1 // pred_check_branch
      %12 = sbr.rel (0) target = $region9
    $region8: #{tpu_custom_call.1} parent=1 // pred_region
      %14 = vsyncadd [#allocation3], 0
      %s15 = sshll.u32 %s1, 4
      %s16 = int_to_ptr.hbm [resolvable:$true] %s15
      %s17 = sshll.u32 [#allocation2], 4
      %s18 = int_to_ptr.vmem [resolvable:$true] %s17
      %23 = dma.hbm_to_vmem [thread:$0]  %s16, 4096, %s18, [#allocation3], 128, 128, 8
    $region9: #{tpu_custom_call.1} parent=1 // pred_fallthru
      _
    // Predicated region
    $region10: #{tpu_custom_call.1} parent=1 // pred_check
      _
    $region11: #{tpu_custom_call.1} parent=1 // pred_check_branch
      %25 = sbr.rel (0) target = $region13
    $region12: #{tpu_custom_call.1} parent=1 // pred_region
      %27 = dma.done [#allocation3], 4096
    $region13: #{tpu_custom_call.1} parent=1 // pred_fallthru
      _
    %v28 = vlaneseq
    %v29 = vand.u32 %v28, 127
    %v30 = vadd.s32 %v29, 128
    %v31 = vld [vmem:[%s0] sm:$0xff]
    %32 = vset.pattern.permute.xlu0 0
    %33 = vperm.xlu0 %32, %v31
    %v34 = vpop.permute.xlu0 %33
    %vm35 = vcmp.eq.s32.totalorder %v34, %v29
    %vm36 = vcmp.eq.s32.totalorder %v34, %v30
    %37 = vset.pattern.permute.xlu0 1
    %38 = vperm.xlu0 %37, %v31
    %v39 = vpop.permute.xlu0 %38
    %vm40 = vcmp.eq.s32.totalorder %v39, %v29
    %vm41 = vcmp.eq.s32.totalorder %v39, %v30
    %vm42 = vmor %vm35, %vm40
    %vm43 = vmor %vm36, %vm41
    %44 = vset.pattern.permute.xlu0 2
    %45 = vperm.xlu0 %44, %v31
    %v46 = vpop.permute.xlu0 %45
    %vm47 = vcmp.eq.s32.totalorder %v46, %v29
    %vm48 = vcmp.eq.s32.totalorder %v46, %v30
    %vm49 = vmor %vm42, %vm47
    %vm50 = vmor %vm43, %vm48
    %51 = vset.pattern.permute.xlu0 3
    %52 = vperm.xlu0 %51, %v31
    %v53 = vpop.permute.xlu0 %52
    %vm54 = vcmp.eq.s32.totalorder %v53, %v29
    %vm55 = vcmp.eq.s32.totalorder %v53, %v30
    %vm56 = vmor %vm49, %vm54
    %vm57 = vmor %vm50, %vm55
    %v58 = vsel %vm56, 1, 0
    %v59 = vsel %vm57, 1, 0
    %v60 = vcvt.s32.f32 %v58
    %v61 = vcvt.s32.f32 %v59
    %v62 = vld [vmem:[#allocation2] sm:$0xff]
    %v63 = vld [vmem:[#allocation2 + $0x8] sm:$0xff]
    %v64 = vld [vmem:[#allocation2 + $0x10] sm:$0xff]
    %v65 = vld [vmem:[#allocation2 + $0x18] sm:$0xff]
    %v66 = vld [vmem:[#allocation2 + $0x20] sm:$0xff]
    %v67 = vld [vmem:[#allocation2 + $0x28] sm:$0xff]
    %v68 = vld [vmem:[#allocation2 + $0x30] sm:$0xff]
    %v69 = vld [vmem:[#allocation2 + $0x38] sm:$0xff]
    %v70 = vld [vmem:[#allocation2 + $0x40] sm:$0xff]
    %v71 = vld [vmem:[#allocation2 + $0x48] sm:$0xff]
    %v72 = vld [vmem:[#allocation2 + $0x50] sm:$0xff]
    %v73 = vld [vmem:[#allocation2 + $0x58] sm:$0xff]
    %v74 = vld [vmem:[#allocation2 + $0x60] sm:$0xff]
    %v75 = vld [vmem:[#allocation2 + $0x68] sm:$0xff]
    %v76 = vld [vmem:[#allocation2 + $0x70] sm:$0xff]
    %v77 = vld [vmem:[#allocation2 + $0x78] sm:$0xff]
    %v78 = vld [vmem:[#allocation2 + $0x80] sm:$0xff]
    %v79 = vld [vmem:[#allocation2 + $0x88] sm:$0xff]
    %v80 = vld [vmem:[#allocation2 + $0x90] sm:$0xff]
    %v81 = vld [vmem:[#allocation2 + $0x98] sm:$0xff]
    %v82 = vld [vmem:[#allocation2 + $0xa0] sm:$0xff]
    %v83 = vld [vmem:[#allocation2 + $0xa8] sm:$0xff]
    %v84 = vld [vmem:[#allocation2 + $0xb0] sm:$0xff]
    %v85 = vld [vmem:[#allocation2 + $0xb8] sm:$0xff]
    %v86 = vld [vmem:[#allocation2 + $0xc0] sm:$0xff]
    %v87 = vld [vmem:[#allocation2 + $0xc8] sm:$0xff]
    %v88 = vld [vmem:[#allocation2 + $0xd0] sm:$0xff]
    %v89 = vld [vmem:[#allocation2 + $0xd8] sm:$0xff]
    %v90 = vld [vmem:[#allocation2 + $0xe0] sm:$0xff]
    %v91 = vld [vmem:[#allocation2 + $0xe8] sm:$0xff]
    %v92 = vld [vmem:[#allocation2 + $0xf0] sm:$0xff]
    %v93 = vld [vmem:[#allocation2 + $0xf8] sm:$0xff]
    %94 = vmatpush.msra.mxu0 %v77
    %95 = vmatpush.msra.mxu0 %v76
    %96 = vmatpush.msra.mxu0 %v75
    %97 = vmatpush.msra.mxu0 %v74
    %98 = vmatpush.msra.mxu0 %v73
    %99 = vmatpush.msra.mxu0 %v72
    %100 = vmatpush.msra.mxu0 %v71
    %101 = vmatpush.msra.mxu0 %v70
    %102 = vmatpush.msra.mxu0 %v69
    %103 = vmatpush.msra.mxu0 %v68
    %104 = vmatpush.msra.mxu0 %v67
    %105 = vmatpush.msra.mxu0 %v66
    %106 = vmatpush.msra.mxu0 %v65
    %107 = vmatpush.msra.mxu0 %v64
    %108 = vmatpush.msra.mxu0 %v63
    %109 = vmatpush.msra.mxu0 %v62
    %110 = vmatmul.f32.gmra.mxu0 %v60
    %v111 = vpop.f32.mrf.mxu0
    %v112 = vadd.f32 0.0, %v111
    %113 = vdwg.mxu0
    %114 = vmatpush.msra.mxu0 %v93
    %115 = vmatpush.msra.mxu0 %v92
    %116 = vmatpush.msra.mxu0 %v91
    %117 = vmatpush.msra.mxu0 %v90
    %118 = vmatpush.msra.mxu0 %v89
    %119 = vmatpush.msra.mxu0 %v88
    %120 = vmatpush.msra.mxu0 %v87
    %121 = vmatpush.msra.mxu0 %v86
    %122 = vmatpush.msra.mxu0 %v85
    %123 = vmatpush.msra.mxu0 %v84
    %124 = vmatpush.msra.mxu0 %v83
    %125 = vmatpush.msra.mxu0 %v82
    %126 = vmatpush.msra.mxu0 %v81
    %127 = vmatpush.msra.mxu0 %v80
    %128 = vmatpush.msra.mxu0 %v79
    %129 = vmatpush.msra.mxu0 %v78
    %130 = vmatmul.f32.gmra.mxu0 %v61
    %v131 = vpop.f32.mrf.mxu0
    %v132 = vadd.f32 %v112, %v131
    %133 = vdwg.mxu0
    %134 = vst [vmem:[#allocation5] sm:$0xff] %v132
    // Predicated region
    $region14: #{tpu_custom_call.1} parent=1 // pred_check
      _
    $region15: #{tpu_custom_call.1} parent=1 // pred_check_branch
      %136 = sbr.rel (0) target = $region17
    $region16: #{tpu_custom_call.1} parent=1 // pred_region
      %138 = vsyncadd [#allocation4], 0
      %s140 = sshll.u32 [#allocation5], 4
      %s141 = int_to_ptr.vmem [resolvable:$true] %s140
      %s142 = sshll.u32 %s2, 4
      %s143 = int_to_ptr.hbm [resolvable:$true] %s142
      %145 = dma.vmem_to_hbm [thread:$0]  %s141, 128, %s143, [#allocation4]
    $region17: #{tpu_custom_call.1} parent=1 // pred_fallthru
      _
    // Predicated region
    $region18: #{tpu_custom_call.1} parent=1 // pred_check
      _
    $region19: #{tpu_custom_call.1} parent=1 // pred_check_branch
      %147 = sbr.rel (0) target = $region21
    $region20: #{tpu_custom_call.1} parent=1 // pred_region
      %149 = dma.done [#allocation4], 128
    $region21: #{tpu_custom_call.1} parent=1 // pred_fallthru
      _
    %150 = vsyncpa [#allocation3], 1
    %151 = vsyncpa [#allocation4], 1

</llo_original>
